<compile_context>
chip_gen: v7x
topology: tpu7x:2x2x1
jax: 0.10.0
libtpu: 0.0.40
codegen_flags: <defaults>
</compile_context>

<pallas_src>
import functools

import numpy as np
import jax
import jax.numpy as jnp
from jax.experimental import pallas as pl
from jax.experimental.pallas import tpu as pltpu


def _round_up(x, m):
    return ((x + m - 1) // m) * m


def _nearest_src_index(coord, size):
    """Replicates the module's double coordinate transform + nearest grid_sample.

    coord: integer-valued pixel coordinates (float array).
    Returns (clipped int32 index, validity mask). Invalid (out-of-bounds) samples
    must be zeroed by the caller (grid_sample padding_mode='zeros').
    """
    if size == 1:
        # Degenerate axis: PyTorch's own renormalization divides by zero here; take the
        # well-defined limit (coordinate 0 -> index 0, the +1 corner is out of bounds;
        # its fractional weight is 0 anyway so this only avoids NaNs).
        idx = jnp.zeros_like(coord).astype(jnp.int32)
        valid = coord <= 0.5
        return idx, valid
    half = (size - 1.0) / 2.0
    gnorm = jnp.clip((coord - half) / half, -1.0, 1.0)          # align_corners=True normalize
    src = ((gnorm + 1.0) * size - 1.0) * 0.5                    # align_corners=False un-normalize
    idx = jnp.floor(src + 0.5)                                  # nearest (round-half-up ties)
    valid = jnp.logical_and(idx >= 0.0, idx <= size - 1.0)
    idx_i = jnp.clip(idx, 0.0, size - 1.0).astype(jnp.int32)
    return idx_i, valid


def _trilinear_kernel(grid_ref, feats_ref, out_ref, myx_ref, mz_ref, *,
                      D, H, W, TD, KD, dot_dtype):
    """One grid point = (batch b, P-tile p, D-tile k).  k is the innermost reduction axis.

    grid_ref : [1, 3, TP]        sampling grid for this P tile (x, y, z rows)
    feats_ref: [1, NF, TD*HW]    feature slab for this D tile (natural layout, no transpose)
    out_ref  : [1, NF, TP]       f32, resident across k -> used directly as the accumulator
    scratch  : myx [HW, TP] f32, mz [Dpad, TP] f32
    """
    k = pl.program_id(2)
    HW = H * W
    TP = myx_ref.shape[1]
    Dpad = mz_ref.shape[0]

    # --- Hoisted: coordinate math + separable one-hot build, once per (b, p-tile). ---
    @pl.when(k == 0)
    def _build():
        g = grid_ref[0]                                  # [3, TP]
        x = jnp.clip(g[0:1, :], -1.0, 1.0)
        y = jnp.clip(g[1:2, :], -1.0, 1.0)
        z = jnp.clip(g[2:3, :], -1.0, 1.0)
        xs = (x + 1.0) * 0.5 * (W - 1.0)
        ys = (y + 1.0) * 0.5 * (H - 1.0)
        zs = (z + 1.0) * 0.5 * (D - 1.0)
        x0 = jnp.floor(xs)
        y0 = jnp.floor(ys)
        z0 = jnp.floor(zs)
        u = xs - x0                                      # fractional weights, [1, TP]
        v = ys - y0
        wz = zs - z0

        ix0, vx0 = _nearest_src_index(x0, W)
        ix1, vx1 = _nearest_src_index(x0 + 1.0, W)
        iy0, vy0 = _nearest_src_index(y0, H)
        iy1, vy1 = _nearest_src_index(y0 + 1.0, H)
        iz0 = jnp.clip(z0.astype(jnp.int32), 0, D - 1)   # .long() trunc + clamp (z0 >= 0)
        iz1 = jnp.clip((z0 + 1.0).astype(jnp.int32), 0, D - 1)

        wx0 = (1.0 - u) * vx0.astype(jnp.float32)
        wx1 = u * vx1.astype(jnp.float32)
        wy0 = (1.0 - v) * vy0.astype(jnp.float32)
        wy1 = v * vy1.astype(jnp.float32)

        # Myx[H*W, TP]: combined xy one-hot with separable weights (4 small passes).
        rowhw = jax.lax.broadcasted_iota(jnp.int32, (HW, TP), 0)
        myx = jnp.where(rowhw == iy0 * W + ix0, wy0 * wx0, 0.0)
        myx = myx + jnp.where(rowhw == iy0 * W + ix1, wy0 * wx1, 0.0)
        myx = myx + jnp.where(rowhw == iy1 * W + ix0, wy1 * wx0, 0.0)
        myx = myx + jnp.where(rowhw == iy1 * W + ix1, wy1 * wx1, 0.0)
        myx_ref[...] = myx

        # Mz[Dpad, TP]: z one-hot; rows >= D (padding) never match since iz* <= D-1.
        rowd = jax.lax.broadcasted_iota(jnp.int32, (Dpad, TP), 0)
        mz_ref[...] = (jnp.where(rowd == iz0, 1.0 - wz, 0.0)
                       + jnp.where(rowd == iz1, wz, 0.0))

        # Output block is resident across k -> use it directly as the accumulator.
        out_ref[...] = jnp.zeros_like(out_ref)

    # --- Per D-tile reduction step: fold Mz into the interp matrix, one MXU matmul. ---
    if KD == 1:
        mzt = mz_ref[...]                                # [TD, TP] (TD == Dpad)
    else:
        start = k * TD
        if TD % 8 == 0:
            start = pl.multiple_of(start, 8)             # sublane-aligned dynamic slice
        mzt = mz_ref[pl.ds(start, TD), :]                # [TD, TP]

    # M_comb[TD*HW, TP] = Mz[d,p] * Myx[hw,p]  -> single contraction with K = TD*HW.
    m_comb = (mzt[:, None, :] * myx_ref[...][None, :, :]).reshape(TD * HW, TP)
    feats2d = feats_ref[0]                               # [NF, TD*HW]
    out_ref[0] += jnp.dot(feats2d.astype(dot_dtype), m_comb.astype(dot_dtype),
                          preferred_element_type=jnp.float32)


def trilinear_interpolation(input_feats, sampling_grid, *, tile_p=None, tile_d=None,
                            precision="float32"):
    """input_feats: [B, F, D, H, W], sampling_grid: [B, GH, GW, 3] -> [B, F, GH, GW].

    precision: "float32" (default, bit-accurate path) or "bfloat16" (native MXU path on
    v6e/v7x: feats + interp matrix cast to bf16 at the dot, accumulation stays f32).
    """
    B, NF, D, H, W = input_feats.shape
    _, GH, GW, _ = sampling_grid.shape
    HW = H * W
    P = GH * GW

    dot_dtype = jnp.bfloat16 if precision == "bfloat16" else jnp.float32
    feats_dtype = dot_dtype
    itemsize = 2 if dot_dtype == jnp.bfloat16 else 4

    # ---- P tiling: pad to a multiple of 128 (lane-dense stores).  TP <= 512 keeps the
    #      TP-scaled scratch (Myx, Mz, M_comb) within v7x's 64 MiB VMEM as well. ----
    if tile_p is None:
        p128 = _round_up(P, 128)
        TP = 512 if p128 % 512 == 0 else (256 if p128 % 256 == 0 else 128)
    else:
        TP = tile_p
    Ppad = _round_up(P, TP)

    # ---- D tiling (reduction axis). Prefer KD == 1 (feats DMA'd once per batch). ----
    feats_cap = 8 * 1024 * 1024         # per-buffer feats tile budget
    mcomb_cap = 4 * 1024 * 1024         # materialized M_comb budget (f32)
    if tile_d is None:
        if NF * D * HW * itemsize <= feats_cap and D * HW * TP * 4 <= mcomb_cap:
            TD = D                       # KD == 1 fast path: feats block constant across P
        else:
            step = 8                     # TD multiple of 8 and TD*HW multiple of 128
            while (step * HW) % 128 != 0:
                step += 8
            TD = step
            while True:
                nxt = TD + step
                if nxt > D:
                    break
                if NF * nxt * HW * itemsize > feats_cap:
                    break
                if nxt * HW * TP * 4 > mcomb_cap:
                    break
                TD = nxt
    else:
        TD = tile_d
    Dpad = _round_up(D, TD)
    KD = Dpad // TD
    KP = Ppad // TP

    # ---- Layout prep (XLA side): pure reshapes, no transpose of feats. ----
    feats_r = input_feats.astype(feats_dtype).reshape(B, NF, D, HW)
    if Dpad > D:
        feats_r = jnp.pad(feats_r, ((0, 0), (0, 0), (0, Dpad - D), (0, 0)))
    feats_r = feats_r.reshape(B, NF, Dpad * HW)
    grid_t = sampling_grid.astype(jnp.float32).reshape(B, P, 3).transpose(0, 2, 1)
    if Ppad > P:
        grid_t = jnp.pad(grid_t, ((0, 0), (0, 0), (0, Ppad - P)))

    # ---- VMEM budget: double-buffered IO tiles + scratch + M_comb temp, capped at 48 MiB
    #      (safe on v7x's 64 MiB physical VMEM; plenty of headroom on v5e/v6e). ----
    est = (2 * NF * TD * HW * itemsize            # feats tiles (double-buffered)
           + 2 * NF * TP * 4                      # out tiles
           + 2 * 3 * TP * 4                       # grid tiles
           + HW * TP * 4 + Dpad * TP * 4          # Myx / Mz scratch
           + TD * HW * TP * 4                     # M_comb temporary
           + (2 << 20))                           # slack
    vmem_limit = int(min(48 * 1024 * 1024, max(32 * 1024 * 1024, est * 5 // 4)))

    out = pl.pallas_call(
        functools.partial(_trilinear_kernel, D=D, H=H, W=W, TD=TD, KD=KD,
                          dot_dtype=dot_dtype),
        out_shape=jax.ShapeDtypeStruct((B, NF, Ppad), jnp.float32),
        grid=(B, KP, KD),
        in_specs=[
            pl.BlockSpec((1, 3, TP), lambda b, p, k: (b, 0, p)),
            pl.BlockSpec((1, NF, TD * HW), lambda b, p, k: (b, 0, k)),
        ],
        out_specs=pl.BlockSpec((1, NF, TP), lambda b, p, k: (b, 0, p)),
        scratch_shapes=[
            pltpu.VMEM((HW, TP), jnp.float32),     # Myx
            pltpu.VMEM((Dpad, TP), jnp.float32),   # Mz
        ],
        compiler_params=pltpu.CompilerParams(
            dimension_semantics=("parallel", "parallel", "arbitrary"),
            vmem_limit_bytes=vmem_limit,
        ),
    )(grid_t, feats_r)

    return out[:, :, :P].reshape(B, NF, GH, GW)


def trilinear_ref(feats, grid):
    """Pure-JAX reference (gather-based) with identical semantics."""
    B, NF, D, H, W = feats.shape
    _, GH, GW, _ = grid.shape
    g = jnp.clip(grid.astype(jnp.float32), -1.0, 1.0)
    scale = jnp.array([W - 1.0, H - 1.0, D - 1.0], jnp.float32)
    g = (g + 1.0) * 0.5 * scale
    x, y, z = g[..., 0], g[..., 1], g[..., 2]
    x0 = jnp.floor(x); y0 = jnp.floor(y); z0 = jnp.floor(z)
    x1, y1, z1 = x0 + 1.0, y0 + 1.0, z0 + 1.0
    u, v, w = x - x0, y - y0, z - z0
    ff = feats.reshape(B, NF, D * H * W).astype(jnp.float32)

    def sample(xc, yc, zc):
        ix, vx = _nearest_src_index(xc, W)
        iy, vy = _nearest_src_index(yc, H)
        iz = jnp.clip(zc.astype(jnp.int32), 0, D - 1)
        flat = (iz * H + iy) * W + ix                       # [B, GH, GW]
        gathered = jnp.take_along_axis(ff, flat.reshape(B, 1, GH * GW), axis=2)
        gathered = gathered.reshape(B, NF, GH, GW)
        mask = (vx & vy).astype(jnp.float32)[:, None]       # [B, 1, GH, GW]
        return gathered * mask

    c000 = sample(x0, y0, z0); c001 = sample(x0, y0, z1)
    c010 = sample(x0, y1, z0); c011 = sample(x0, y1, z1)
    c100 = sample(x1, y0, z0); c101 = sample(x1, y0, z1)
    c110 = sample(x1, y1, z0); c111 = sample(x1, y1, z1)
    u, v, w = u[:, None], v[:, None], w[:, None]
    return ((1 - u) * (1 - v) * (1 - w) * c000 + (1 - u) * (1 - v) * w * c001 +
            (1 - u) * v * (1 - w) * c010 + (1 - u) * v * w * c011 +
            u * (1 - v) * (1 - w) * c100 + u * (1 - v) * w * c101 +
            u * v * (1 - w) * c110 + u * v * w * c111)


if __name__ == "__main__":
    key = jax.random.PRNGKey(0)
    k1, k2, k3, k4 = jax.random.split(key, 4)

    # Test 1: the module's example shapes -> KD = 1 fast path, single P tile.
    B, NF, D, H, W = 2, 4, 4, 8, 8
    GH, GW = 8, 8
    input_feats = jax.random.normal(k1, (B, NF, D, H, W), dtype=jnp.float32)
    sampling_grid = jax.random.uniform(k2, (B, GH, GW, 3), dtype=jnp.float32,
                                       minval=-1.1, maxval=1.1)
    out = jax.block_until_ready(trilinear_interpolation(input_feats, sampling_grid))
    assert out.shape == (B, NF, GH, GW)
    ref = trilinear_ref(input_feats, sampling_grid)
    if not np.allclose(np.asarray(out), np.asarray(ref), atol=1e-5, rtol=1e-5):
        raise SystemExit("mismatch vs pure-JAX reference (test 1)")

    # Test 2: exercises P padding + multiple P tiles and the tiled-D reduction path
    # (D=12 padded to 16, TD=8 -> 2 reduction steps; P=400 padded to 512, TP=128 -> 4 tiles).
    B2, NF2, D2, H2, W2 = 1, 8, 12, 8, 8
    GH2, GW2 = 20, 20
    feats2 = jax.random.normal(k3, (B2, NF2, D2, H2, W2), dtype=jnp.float32)
    grid2 = jax.random.uniform(k4, (B2, GH2, GW2, 3), dtype=jnp.float32,
                               minval=-1.2, maxval=1.2)
    out2 = jax.block_until_ready(
        trilinear_interpolation(feats2, grid2, tile_p=128, tile_d=8))
    ref2 = trilinear_ref(feats2, grid2)
    if not np.allclose(np.asarray(out2), np.asarray(ref2), atol=1e-5, rtol=1e-5):
        raise SystemExit("mismatch vs pure-JAX reference (test 2)")

    print("KERNEL_OK")
</pallas_src>

<mosaic_0001>
module attributes {stable_mosaic.version = 11 : i64} {
  func.func @_trilinear_kernel(%arg0: i32, %arg1: i32, %arg2: i32, %arg3: memref<1x3x128xf32, #tpu.memory_space<vmem>>, %arg4: memref<1x4x256xf32, #tpu.memory_space<vmem>>, %arg5: memref<1x4x128xf32, #tpu.memory_space<vmem>>, %arg6: memref<64x128xf32, #tpu.memory_space<vmem>>, %arg7: memref<4x128xf32, #tpu.memory_space<vmem>>) attributes {dimension_semantics = [#tpu.dimension_semantics<parallel>, #tpu.dimension_semantics<parallel>, #tpu.dimension_semantics<arbitrary>], iteration_bounds = array<i64: 2, 1, 1>, scalar_prefetch = 0 : i64, scratch_operands = 2 : i64, tpu.core_type = #tpu.core_type<tc>, window_params = [{transform_indices = @transform_0, window_bounds = array<i64: 1, 3, 128>}, {transform_indices = @transform_1, window_bounds = array<i64: 1, 4, 256>}, {transform_indices = @transform_2, window_bounds = array<i64: 1, 4, 128>}]} {
    %c0_i32 = arith.constant 0 : i32
    %0 = arith.cmpi eq, %arg2, %c0_i32 : i32
    %1 = arith.extui %0 : i1 to i32
    %c0_i32_0 = arith.constant 0 : i32
    %2 = arith.cmpi ne, %1, %c0_i32_0 : i32
    scf.if %2 {
      %c0_13 = arith.constant 0 : index
      %c0_14 = arith.constant 0 : index
      %c0_15 = arith.constant 0 : index
      %20 = vector.load %arg3[%c0_13, %c0_14, %c0_15] : memref<1x3x128xf32, #tpu.memory_space<vmem>>, vector<1x3x128xf32>
      %21 = vector.shape_cast %20 : vector<1x3x128xf32> to vector<3x128xf32>
      %22 = vector.extract_strided_slice %21 {offsets = [0, 0], sizes = [1, 128], strides = [1, 1]} : vector<3x128xf32> to vector<1x128xf32>
      %cst_16 = arith.constant -1.000000e+00 : f32
      %cst_17 = arith.constant 1.000000e+00 : f32
      %23 = vector.broadcast %cst_16 : f32 to vector<1x128xf32>
      %24 = arith.maximumf %23, %22 : vector<1x128xf32>
      %25 = vector.broadcast %cst_17 : f32 to vector<1x128xf32>
      %26 = arith.minimumf %25, %24 : vector<1x128xf32>
      %27 = vector.extract_strided_slice %21 {offsets = [1, 0], sizes = [1, 128], strides = [1, 1]} : vector<3x128xf32> to vector<1x128xf32>
      %cst_18 = arith.constant -1.000000e+00 : f32
      %cst_19 = arith.constant 1.000000e+00 : f32
      %28 = vector.broadcast %cst_18 : f32 to vector<1x128xf32>
      %29 = arith.maximumf %28, %27 : vector<1x128xf32>
      %30 = vector.broadcast %cst_19 : f32 to vector<1x128xf32>
      %31 = arith.minimumf %30, %29 : vector<1x128xf32>
      %32 = vector.extract_strided_slice %21 {offsets = [2, 0], sizes = [1, 128], strides = [1, 1]} : vector<3x128xf32> to vector<1x128xf32>
      %cst_20 = arith.constant -1.000000e+00 : f32
      %cst_21 = arith.constant 1.000000e+00 : f32
      %33 = vector.broadcast %cst_20 : f32 to vector<1x128xf32>
      %34 = arith.maximumf %33, %32 : vector<1x128xf32>
      %35 = vector.broadcast %cst_21 : f32 to vector<1x128xf32>
      %36 = arith.minimumf %35, %34 : vector<1x128xf32>
      %cst_22 = arith.constant 1.000000e+00 : f32
      %37 = vector.broadcast %cst_22 : f32 to vector<1x128xf32>
      %38 = arith.addf %26, %37 : vector<1x128xf32>
      %cst_23 = arith.constant 5.000000e-01 : f32
      %39 = vector.broadcast %cst_23 : f32 to vector<1x128xf32>
      %40 = arith.mulf %38, %39 : vector<1x128xf32>
      %cst_24 = arith.constant 7.000000e+00 : f32
      %41 = vector.broadcast %cst_24 : f32 to vector<1x128xf32>
      %42 = arith.mulf %40, %41 : vector<1x128xf32>
      %cst_25 = arith.constant 1.000000e+00 : f32
      %43 = vector.broadcast %cst_25 : f32 to vector<1x128xf32>
      %44 = arith.addf %31, %43 : vector<1x128xf32>
      %cst_26 = arith.constant 5.000000e-01 : f32
      %45 = vector.broadcast %cst_26 : f32 to vector<1x128xf32>
      %46 = arith.mulf %44, %45 : vector<1x128xf32>
      %cst_27 = arith.constant 7.000000e+00 : f32
      %47 = vector.broadcast %cst_27 : f32 to vector<1x128xf32>
      %48 = arith.mulf %46, %47 : vector<1x128xf32>
      %cst_28 = arith.constant 1.000000e+00 : f32
      %49 = vector.broadcast %cst_28 : f32 to vector<1x128xf32>
      %50 = arith.addf %36, %49 : vector<1x128xf32>
      %cst_29 = arith.constant 5.000000e-01 : f32
      %51 = vector.broadcast %cst_29 : f32 to vector<1x128xf32>
      %52 = arith.mulf %50, %51 : vector<1x128xf32>
      %cst_30 = arith.constant 3.000000e+00 : f32
      %53 = vector.broadcast %cst_30 : f32 to vector<1x128xf32>
      %54 = arith.mulf %52, %53 : vector<1x128xf32>
      %55 = math.floor %42 : vector<1x128xf32>
      %56 = math.floor %48 : vector<1x128xf32>
      %57 = math.floor %54 : vector<1x128xf32>
      %58 = arith.subf %42, %55 : vector<1x128xf32>
      %59 = arith.subf %48, %56 : vector<1x128xf32>
      %60 = arith.subf %54, %57 : vector<1x128xf32>
      %cst_31 = arith.constant 3.500000e+00 : f32
      %61 = vector.broadcast %cst_31 : f32 to vector<1x128xf32>
      %62 = arith.subf %55, %61 : vector<1x128xf32>
      %cst_32 = arith.constant 3.500000e+00 : f32
      %63 = vector.broadcast %cst_32 : f32 to vector<1x128xf32>
      %64 = arith.divf %62, %63 : vector<1x128xf32>
      %cst_33 = arith.constant -1.000000e+00 : f32
      %cst_34 = arith.constant 1.000000e+00 : f32
      %65 = vector.broadcast %cst_33 : f32 to vector<1x128xf32>
      %66 = arith.maximumf %65, %64 : vector<1x128xf32>
      %67 = vector.broadcast %cst_34 : f32 to vector<1x128xf32>
      %68 = arith.minimumf %67, %66 : vector<1x128xf32>
      %cst_35 = arith.constant 1.000000e+00 : f32
      %69 = vector.broadcast %cst_35 : f32 to vector<1x128xf32>
      %70 = arith.addf %68, %69 : vector<1x128xf32>
      %cst_36 = arith.constant 8.000000e+00 : f32
      %71 = vector.broadcast %cst_36 : f32 to vector<1x128xf32>
      %72 = arith.mulf %70, %71 : vector<1x128xf32>
      %cst_37 = arith.constant 1.000000e+00 : f32
      %73 = vector.broadcast %cst_37 : f32 to vector<1x128xf32>
      %74 = arith.subf %72, %73 : vector<1x128xf32>
      %cst_38 = arith.constant 5.000000e-01 : f32
      %75 = vector.broadcast %cst_38 : f32 to vector<1x128xf32>
      %76 = arith.mulf %74, %75 : vector<1x128xf32>
      %cst_39 = arith.constant 5.000000e-01 : f32
      %77 = vector.broadcast %cst_39 : f32 to vector<1x128xf32>
      %78 = arith.addf %76, %77 : vector<1x128xf32>
      %79 = math.floor %78 : vector<1x128xf32>
      %cst_40 = arith.constant 0.000000e+00 : f32
      %80 = vector.broadcast %cst_40 : f32 to vector<1x128xf32>
      %81 = arith.cmpf oge, %79, %80 : vector<1x128xf32>
      %cst_41 = arith.constant 7.000000e+00 : f32
      %82 = vector.broadcast %cst_41 : f32 to vector<1x128xf32>
      %83 = arith.cmpf ole, %79, %82 : vector<1x128xf32>
      %84 = arith.andi %81, %83 : vector<1x128xi1>
      %cst_42 = arith.constant 0.000000e+00 : f32
      %cst_43 = arith.constant 7.000000e+00 : f32
      %85 = vector.broadcast %cst_42 : f32 to vector<1x128xf32>
      %86 = arith.maximumf %85, %79 : vector<1x128xf32>
      %87 = vector.broadcast %cst_43 : f32 to vector<1x128xf32>
      %88 = arith.minimumf %87, %86 : vector<1x128xf32>
      %89 = arith.fptosi %88 : vector<1x128xf32> to vector<1x128xi32>
      %cst_44 = arith.constant 1.000000e+00 : f32
      %90 = vector.broadcast %cst_44 : f32 to vector<1x128xf32>
      %91 = arith.addf %55, %90 : vector<1x128xf32>
      %cst_45 = arith.constant 3.500000e+00 : f32
      %92 = vector.broadcast %cst_45 : f32 to vector<1x128xf32>
      %93 = arith.subf %91, %92 : vector<1x128xf32>
      %cst_46 = arith.constant 3.500000e+00 : f32
      %94 = vector.broadcast %cst_46 : f32 to vector<1x128xf32>
      %95 = arith.divf %93, %94 : vector<1x128xf32>
      %cst_47 = arith.constant -1.000000e+00 : f32
      %cst_48 = arith.constant 1.000000e+00 : f32
      %96 = vector.broadcast %cst_47 : f32 to vector<1x128xf32>
      %97 = arith.maximumf %96, %95 : vector<1x128xf32>
      %98 = vector.broadcast %cst_48 : f32 to vector<1x128xf32>
      %99 = arith.minimumf %98, %97 : vector<1x128xf32>
      %cst_49 = arith.constant 1.000000e+00 : f32
      %100 = vector.broadcast %cst_49 : f32 to vector<1x128xf32>
      %101 = arith.addf %99, %100 : vector<1x128xf32>
      %cst_50 = arith.constant 8.000000e+00 : f32
      %102 = vector.broadcast %cst_50 : f32 to vector<1x128xf32>
      %103 = arith.mulf %101, %102 : vector<1x128xf32>
      %cst_51 = arith.constant 1.000000e+00 : f32
      %104 = vector.broadcast %cst_51 : f32 to vector<1x128xf32>
      %105 = arith.subf %103, %104 : vector<1x128xf32>
      %cst_52 = arith.constant 5.000000e-01 : f32
      %106 = vector.broadcast %cst_52 : f32 to vector<1x128xf32>
      %107 = arith.mulf %105, %106 : vector<1x128xf32>
      %cst_53 = arith.constant 5.000000e-01 : f32
      %108 = vector.broadcast %cst_53 : f32 to vector<1x128xf32>
      %109 = arith.addf %107, %108 : vector<1x128xf32>
      %110 = math.floor %109 : vector<1x128xf32>
      %cst_54 = arith.constant 0.000000e+00 : f32
      %111 = vector.broadcast %cst_54 : f32 to vector<1x128xf32>
      %112 = arith.cmpf oge, %110, %111 : vector<1x128xf32>
      %cst_55 = arith.constant 7.000000e+00 : f32
      %113 = vector.broadcast %cst_55 : f32 to vector<1x128xf32>
      %114 = arith.cmpf ole, %110, %113 : vector<1x128xf32>
      %115 = arith.andi %112, %114 : vector<1x128xi1>
      %cst_56 = arith.constant 0.000000e+00 : f32
      %cst_57 = arith.constant 7.000000e+00 : f32
      %116 = vector.broadcast %cst_56 : f32 to vector<1x128xf32>
      %117 = arith.maximumf %116, %110 : vector<1x128xf32>
      %118 = vector.broadcast %cst_57 : f32 to vector<1x128xf32>
      %119 = arith.minimumf %118, %117 : vector<1x128xf32>
      %120 = arith.fptosi %119 : vector<1x128xf32> to vector<1x128xi32>
      %cst_58 = arith.constant 3.500000e+00 : f32
      %121 = vector.broadcast %cst_58 : f32 to vector<1x128xf32>
      %122 = arith.subf %56, %121 : vector<1x128xf32>
      %cst_59 = arith.constant 3.500000e+00 : f32
      %123 = vector.broadcast %cst_59 : f32 to vector<1x128xf32>
      %124 = arith.divf %122, %123 : vector<1x128xf32>
      %cst_60 = arith.constant -1.000000e+00 : f32
      %cst_61 = arith.constant 1.000000e+00 : f32
      %125 = vector.broadcast %cst_60 : f32 to vector<1x128xf32>
      %126 = arith.maximumf %125, %124 : vector<1x128xf32>
      %127 = vector.broadcast %cst_61 : f32 to vector<1x128xf32>
      %128 = arith.minimumf %127, %126 : vector<1x128xf32>
      %cst_62 = arith.constant 1.000000e+00 : f32
      %129 = vector.broadcast %cst_62 : f32 to vector<1x128xf32>
      %130 = arith.addf %128, %129 : vector<1x128xf32>
      %cst_63 = arith.constant 8.000000e+00 : f32
      %131 = vector.broadcast %cst_63 : f32 to vector<1x128xf32>
      %132 = arith.mulf %130, %131 : vector<1x128xf32>
      %cst_64 = arith.constant 1.000000e+00 : f32
      %133 = vector.broadcast %cst_64 : f32 to vector<1x128xf32>
      %134 = arith.subf %132, %133 : vector<1x128xf32>
      %cst_65 = arith.constant 5.000000e-01 : f32
      %135 = vector.broadcast %cst_65 : f32 to vector<1x128xf32>
      %136 = arith.mulf %134, %135 : vector<1x128xf32>
      %cst_66 = arith.constant 5.000000e-01 : f32
      %137 = vector.broadcast %cst_66 : f32 to vector<1x128xf32>
      %138 = arith.addf %136, %137 : vector<1x128xf32>
      %139 = math.floor %138 : vector<1x128xf32>
      %cst_67 = arith.constant 0.000000e+00 : f32
      %140 = vector.broadcast %cst_67 : f32 to vector<1x128xf32>
      %141 = arith.cmpf oge, %139, %140 : vector<1x128xf32>
      %cst_68 = arith.constant 7.000000e+00 : f32
      %142 = vector.broadcast %cst_68 : f32 to vector<1x128xf32>
      %143 = arith.cmpf ole, %139, %142 : vector<1x128xf32>
      %144 = arith.andi %141, %143 : vector<1x128xi1>
      %cst_69 = arith.constant 0.000000e+00 : f32
      %cst_70 = arith.constant 7.000000e+00 : f32
      %145 = vector.broadcast %cst_69 : f32 to vector<1x128xf32>
      %146 = arith.maximumf %145, %139 : vector<1x128xf32>
      %147 = vector.broadcast %cst_70 : f32 to vector<1x128xf32>
      %148 = arith.minimumf %147, %146 : vector<1x128xf32>
      %149 = arith.fptosi %148 : vector<1x128xf32> to vector<1x128xi32>
      %cst_71 = arith.constant 1.000000e+00 : f32
      %150 = vector.broadcast %cst_71 : f32 to vector<1x128xf32>
      %151 = arith.addf %56, %150 : vector<1x128xf32>
      %cst_72 = arith.constant 3.500000e+00 : f32
      %152 = vector.broadcast %cst_72 : f32 to vector<1x128xf32>
      %153 = arith.subf %151, %152 : vector<1x128xf32>
      %cst_73 = arith.constant 3.500000e+00 : f32
      %154 = vector.broadcast %cst_73 : f32 to vector<1x128xf32>
      %155 = arith.divf %153, %154 : vector<1x128xf32>
      %cst_74 = arith.constant -1.000000e+00 : f32
      %cst_75 = arith.constant 1.000000e+00 : f32
      %156 = vector.broadcast %cst_74 : f32 to vector<1x128xf32>
      %157 = arith.maximumf %156, %155 : vector<1x128xf32>
      %158 = vector.broadcast %cst_75 : f32 to vector<1x128xf32>
      %159 = arith.minimumf %158, %157 : vector<1x128xf32>
      %cst_76 = arith.constant 1.000000e+00 : f32
      %160 = vector.broadcast %cst_76 : f32 to vector<1x128xf32>
      %161 = arith.addf %159, %160 : vector<1x128xf32>
      %cst_77 = arith.constant 8.000000e+00 : f32
      %162 = vector.broadcast %cst_77 : f32 to vector<1x128xf32>
      %163 = arith.mulf %161, %162 : vector<1x128xf32>
      %cst_78 = arith.constant 1.000000e+00 : f32
      %164 = vector.broadcast %cst_78 : f32 to vector<1x128xf32>
      %165 = arith.subf %163, %164 : vector<1x128xf32>
      %cst_79 = arith.constant 5.000000e-01 : f32
      %166 = vector.broadcast %cst_79 : f32 to vector<1x128xf32>
      %167 = arith.mulf %165, %166 : vector<1x128xf32>
      %cst_80 = arith.constant 5.000000e-01 : f32
      %168 = vector.broadcast %cst_80 : f32 to vector<1x128xf32>
      %169 = arith.addf %167, %168 : vector<1x128xf32>
      %170 = math.floor %169 : vector<1x128xf32>
      %cst_81 = arith.constant 0.000000e+00 : f32
      %171 = vector.broadcast %cst_81 : f32 to vector<1x128xf32>
      %172 = arith.cmpf oge, %170, %171 : vector<1x128xf32>
      %cst_82 = arith.constant 7.000000e+00 : f32
      %173 = vector.broadcast %cst_82 : f32 to vector<1x128xf32>
      %174 = arith.cmpf ole, %170, %173 : vector<1x128xf32>
      %175 = arith.andi %172, %174 : vector<1x128xi1>
      %cst_83 = arith.constant 0.000000e+00 : f32
      %cst_84 = arith.constant 7.000000e+00 : f32
      %176 = vector.broadcast %cst_83 : f32 to vector<1x128xf32>
      %177 = arith.maximumf %176, %170 : vector<1x128xf32>
      %178 = vector.broadcast %cst_84 : f32 to vector<1x128xf32>
      %179 = arith.minimumf %178, %177 : vector<1x128xf32>
      %180 = arith.fptosi %179 : vector<1x128xf32> to vector<1x128xi32>
      %181 = arith.fptosi %57 : vector<1x128xf32> to vector<1x128xi32>
      %c0_i32_85 = arith.constant 0 : i32
      %c3_i32 = arith.constant 3 : i32
      %182 = vector.broadcast %c0_i32_85 : i32 to vector<1x128xi32>
      %183 = arith.maxsi %182, %181 : vector<1x128xi32>
      %184 = vector.broadcast %c3_i32 : i32 to vector<1x128xi32>
      %185 = arith.minsi %184, %183 : vector<1x128xi32>
      %cst_86 = arith.constant 1.000000e+00 : f32
      %186 = vector.broadcast %cst_86 : f32 to vector<1x128xf32>
      %187 = arith.addf %57, %186 : vector<1x128xf32>
      %188 = arith.fptosi %187 : vector<1x128xf32> to vector<1x128xi32>
      %c0_i32_87 = arith.constant 0 : i32
      %c3_i32_88 = arith.constant 3 : i32
      %189 = vector.broadcast %c0_i32_87 : i32 to vector<1x128xi32>
      %190 = arith.maxsi %189, %188 : vector<1x128xi32>
      %191 = vector.broadcast %c3_i32_88 : i32 to vector<1x128xi32>
      %192 = arith.minsi %191, %190 : vector<1x128xi32>
      %cst_89 = arith.constant 1.000000e+00 : f32
      %193 = vector.broadcast %cst_89 : f32 to vector<1x128xf32>
      %194 = arith.subf %193, %58 : vector<1x128xf32>
      %195 = arith.extui %84 : vector<1x128xi1> to vector<1x128xi32>
      %196 = arith.sitofp %195 : vector<1x128xi32> to vector<1x128xf32>
      %197 = arith.mulf %194, %196 : vector<1x128xf32>
      %198 = arith.extui %115 : vector<1x128xi1> to vector<1x128xi32>
      %199 = arith.sitofp %198 : vector<1x128xi32> to vector<1x128xf32>
      %200 = arith.mulf %58, %199 : vector<1x128xf32>
      %cst_90 = arith.constant 1.000000e+00 : f32
      %201 = vector.broadcast %cst_90 : f32 to vector<1x128xf32>
      %202 = arith.subf %201, %59 : vector<1x128xf32>
      %203 = arith.extui %144 : vector<1x128xi1> to vector<1x128xi32>
      %204 = arith.sitofp %203 : vector<1x128xi32> to vector<1x128xf32>
      %205 = arith.mulf %202, %204 : vector<1x128xf32>
      %206 = arith.extui %175 : vector<1x128xi1> to vector<1x128xi32>
      %207 = arith.sitofp %206 : vector<1x128xi32> to vector<1x128xf32>
      %208 = arith.mulf %59, %207 : vector<1x128xf32>
      %209 = tpu.iota {dimensions = array<i32: 0>} : vector<64x128xi32>
      %c8_i32 = arith.constant 8 : i32
      %210 = vector.broadcast %c8_i32 : i32 to vector<1x128xi32>
      %211 = arith.muli %149, %210 : vector<1x128xi32>
      %212 = arith.addi %211, %89 : vector<1x128xi32>
      %213 = vector.broadcast %212 : vector<1x128xi32> to vector<64x128xi32>
      %214 = arith.cmpi eq, %209, %213 : vector<64x128xi32>
      %215 = arith.mulf %205, %197 : vector<1x128xf32>
      %cst_91 = arith.constant 0.000000e+00 : f32
      %216 = vector.shape_cast %215 : vector<1x128xf32> to vector<1x128xf32>
      %217 = vector.broadcast %216 : vector<1x128xf32> to vector<64x128xf32>
      %218 = vector.broadcast %cst_91 : f32 to vector<64x128xf32>
      %219 = arith.select %214, %217, %218 : vector<64x128xi1>, vector<64x128xf32>
      %c8_i32_92 = arith.constant 8 : i32
      %220 = vector.broadcast %c8_i32_92 : i32 to vector<1x128xi32>
      %221 = arith.muli %149, %220 : vector<1x128xi32>
      %222 = arith.addi %221, %120 : vector<1x128xi32>
      %223 = vector.broadcast %222 : vector<1x128xi32> to vector<64x128xi32>
      %224 = arith.cmpi eq, %209, %223 : vector<64x128xi32>
      %225 = arith.mulf %205, %200 : vector<1x128xf32>
      %cst_93 = arith.constant 0.000000e+00 : f32
      %226 = vector.shape_cast %225 : vector<1x128xf32> to vector<1x128xf32>
      %227 = vector.broadcast %226 : vector<1x128xf32> to vector<64x128xf32>
      %228 = vector.broadcast %cst_93 : f32 to vector<64x128xf32>
      %229 = arith.select %224, %227, %228 : vector<64x128xi1>, vector<64x128xf32>
      %230 = arith.addf %219, %229 : vector<64x128xf32>
      %c8_i32_94 = arith.constant 8 : i32
      %231 = vector.broadcast %c8_i32_94 : i32 to vector<1x128xi32>
      %232 = arith.muli %180, %231 : vector<1x128xi32>
      %233 = arith.addi %232, %89 : vector<1x128xi32>
      %234 = vector.broadcast %233 : vector<1x128xi32> to vector<64x128xi32>
      %235 = arith.cmpi eq, %209, %234 : vector<64x128xi32>
      %236 = arith.mulf %208, %197 : vector<1x128xf32>
      %cst_95 = arith.constant 0.000000e+00 : f32
      %237 = vector.shape_cast %236 : vector<1x128xf32> to vector<1x128xf32>
      %238 = vector.broadcast %237 : vector<1x128xf32> to vector<64x128xf32>
      %239 = vector.broadcast %cst_95 : f32 to vector<64x128xf32>
      %240 = arith.select %235, %238, %239 : vector<64x128xi1>, vector<64x128xf32>
      %241 = arith.addf %230, %240 : vector<64x128xf32>
      %c8_i32_96 = arith.constant 8 : i32
      %242 = vector.broadcast %c8_i32_96 : i32 to vector<1x128xi32>
      %243 = arith.muli %180, %242 : vector<1x128xi32>
      %244 = arith.addi %243, %120 : vector<1x128xi32>
      %245 = vector.broadcast %244 : vector<1x128xi32> to vector<64x128xi32>
      %246 = arith.cmpi eq, %209, %245 : vector<64x128xi32>
      %247 = arith.mulf %208, %200 : vector<1x128xf32>
      %cst_97 = arith.constant 0.000000e+00 : f32
      %248 = vector.shape_cast %247 : vector<1x128xf32> to vector<1x128xf32>
      %249 = vector.broadcast %248 : vector<1x128xf32> to vector<64x128xf32>
      %250 = vector.broadcast %cst_97 : f32 to vector<64x128xf32>
      %251 = arith.select %246, %249, %250 : vector<64x128xi1>, vector<64x128xf32>
      %252 = arith.addf %241, %251 : vector<64x128xf32>
      %c0_98 = arith.constant 0 : index
      %c0_99 = arith.constant 0 : index
      %253 = vector.load %arg6[%c0_98, %c0_99] : memref<64x128xf32, #tpu.memory_space<vmem>>, vector<64x128xf32>
      tpu.vector_store %arg6[%c0_98, %c0_99], %252 {strides = array<i32>} : memref<64x128xf32, #tpu.memory_space<vmem>>, vector<64x128xf32>,
      %254 = tpu.iota {dimensions = array<i32: 0>} : vector<4x128xi32>
      %255 = vector.broadcast %185 : vector<1x128xi32> to vector<4x128xi32>
      %256 = arith.cmpi eq, %254, %255 : vector<4x128xi32>
      %cst_100 = arith.constant 1.000000e+00 : f32
      %257 = vector.broadcast %cst_100 : f32 to vector<1x128xf32>
      %258 = arith.subf %257, %60 : vector<1x128xf32>
      %cst_101 = arith.constant 0.000000e+00 : f32
      %259 = vector.shape_cast %258 : vector<1x128xf32> to vector<1x128xf32>
      %260 = vector.broadcast %259 : vector<1x128xf32> to vector<4x128xf32>
      %261 = vector.broadcast %cst_101 : f32 to vector<4x128xf32>
      %262 = arith.select %256, %260, %261 : vector<4x128xi1>, vector<4x128xf32>
      %263 = vector.broadcast %192 : vector<1x128xi32> to vector<4x128xi32>
      %264 = arith.cmpi eq, %254, %263 : vector<4x128xi32>
      %cst_102 = arith.constant 0.000000e+00 : f32
      %265 = vector.shape_cast %60 : vector<1x128xf32> to vector<1x128xf32>
      %266 = vector.broadcast %265 : vector<1x128xf32> to vector<4x128xf32>
      %267 = vector.broadcast %cst_102 : f32 to vector<4x128xf32>
      %268 = arith.select %264, %266, %267 : vector<4x128xi1>, vector<4x128xf32>
      %269 = arith.addf %262, %268 : vector<4x128xf32>
      %c0_103 = arith.constant 0 : index
      %c0_104 = arith.constant 0 : index
      %270 = vector.load %arg7[%c0_103, %c0_104] : memref<4x128xf32, #tpu.memory_space<vmem>>, vector<4x128xf32>
      tpu.vector_store %arg7[%c0_103, %c0_104], %269 {strides = array<i32>} : memref<4x128xf32, #tpu.memory_space<vmem>>, vector<4x128xf32>,
      %cst_105 = arith.constant 0.000000e+00 : f32
      %271 = vector.broadcast %cst_105 : f32 to vector<1x4x128xf32>
      %c0_106 = arith.constant 0 : index
      %c0_107 = arith.constant 0 : index
      %c0_108 = arith.constant 0 : index
      %272 = vector.load %arg5[%c0_106, %c0_107, %c0_108] : memref<1x4x128xf32, #tpu.memory_space<vmem>>, vector<1x4x128xf32>
      tpu.vector_store %arg5[%c0_106, %c0_107, %c0_108], %271 {strides = array<i32>} : memref<1x4x128xf32, #tpu.memory_space<vmem>>, vector<1x4x128xf32>,
    } else {
    }
    %c0 = arith.constant 0 : index
    %c0_1 = arith.constant 0 : index
    %3 = vector.load %arg7[%c0, %c0_1] : memref<4x128xf32, #tpu.memory_space<vmem>>, vector<4x128xf32>
    %4 = vector.shape_cast %3 : vector<4x128xf32> to vector<4x1x128xf32>
    %c0_2 = arith.constant 0 : index
    %c0_3 = arith.constant 0 : index
    %5 = vector.load %arg6[%c0_2, %c0_3] : memref<64x128xf32, #tpu.memory_space<vmem>>, vector<64x128xf32>
    %6 = vector.shape_cast %5 : vector<64x128xf32> to vector<1x64x128xf32>
    %7 = vector.broadcast %4 : vector<4x1x128xf32> to vector<4x64x128xf32>
    %8 = vector.broadcast %6 : vector<1x64x128xf32> to vector<4x64x128xf32>
    %9 = arith.mulf %7, %8 : vector<4x64x128xf32>
    %10 = vector.shape_cast %9 : vector<4x64x128xf32> to vector<256x128xf32>
    %c0_4 = arith.constant 0 : index
    %c0_5 = arith.constant 0 : index
    %c0_6 = arith.constant 0 : index
    %11 = vector.load %arg4[%c0_4, %c0_5, %c0_6] : memref<1x4x256xf32, #tpu.memory_space<vmem>>, vector<1x4x256xf32>
    %12 = vector.shape_cast %11 : vector<1x4x256xf32> to vector<4x256xf32>
    %c0_7 = arith.constant 0 : index
    %c0_8 = arith.constant 0 : index
    %c0_9 = arith.constant 0 : index
    %13 = vector.load %arg5[%c0_7, %c0_8, %c0_9] : memref<1x4x128xf32, #tpu.memory_space<vmem>>, vector<1x4x128xf32>
    %14 = vector.shape_cast %13 : vector<1x4x128xf32> to vector<4x128xf32>
    %cst = arith.constant dense<0.000000e+00> : vector<4x128xf32>
    %15 = tpu.matmul %12, %10, %cst {dimension_numbers = #tpu.dot_dimension_numbers<[1], [0], [0], [1], [0, 0, 1, 1], [], []>} : vector<4x256xf32>, vector<256x128xf32>, vector<4x128xf32> -> vector<4x128xf32>
    %16 = arith.addf %14, %15 : vector<4x128xf32>
    %c0_10 = arith.constant 0 : index
    %c0_11 = arith.constant 0 : index
    %c0_12 = arith.constant 0 : index
    %17 = vector.load %arg5[%c0_10, %c0_11, %c0_12] : memref<1x4x128xf32, #tpu.memory_space<vmem>>, vector<1x4x128xf32>
    %18 = vector.shape_cast %17 : vector<1x4x128xf32> to vector<4x128xf32>
    %19 = vector.shape_cast %16 : vector<4x128xf32> to vector<1x4x128xf32>
    tpu.vector_store %arg5[%c0_10, %c0_11, %c0_12], %19 {strides = array<i32>} : memref<1x4x128xf32, #tpu.memory_space<vmem>>, vector<1x4x128xf32>,
    return
  }
  func.func @transform_0(%arg0: i32, %arg1: i32, %arg2: i32) -> (i32, i32, i32) {
    %c0_i32 = arith.constant 0 : i32
    %c0_i32_0 = arith.constant 0 : i32
    return %arg0, %c0_i32, %arg1 : i32, i32, i32
  }
  func.func @transform_1(%arg0: i32, %arg1: i32, %arg2: i32) -> (i32, i32, i32) {
    %c0_i32 = arith.constant 0 : i32
    %c0_i32_0 = arith.constant 0 : i32
    return %arg0, %c0_i32, %arg2 : i32, i32, i32
  }
  func.func @transform_2(%arg0: i32, %arg1: i32, %arg2: i32) -> (i32, i32, i32) {
    %c0_i32 = arith.constant 0 : i32
    %c0_i32_0 = arith.constant 0 : i32
    return %arg0, %c0_i32, %arg1 : i32, i32, i32
  }
}

</mosaic_0001>

<llo_original>
// kernel: tpu_custom_call.1
$region0: #{tpu_custom_call.1}
  #allocation0 [shape = 'u32[]', space=smem, size = 0x4, offset = 0x4, fixed_abs, tag = 'smem constant byte address 0x4 - core index']
  #allocation1 [shape = 'u32[144,128]{1,0:T(1,128)}', space=vmem, size = 0x12000, scoped, tag = 'internal scratch']
  #allocation2 [shape = 'f32[64,128]{1,0:T(8,128)}', space=vmem, size = 0x8000, scoped, tag = 'scratch operand']
  #allocation3 [shape = 'f32[4,128]{1,0:T(4,128)}', space=vmem, size = 0x800, scoped, tag = 'scratch operand']
  %s0 = inlined_call_operand.vmem [shape: f32[2,3,128], index: 0, kind: input, shape index: {}]
  %s1 = inlined_call_operand.vmem [shape: f32[2,4,256], index: 1, kind: input, shape index: {}]
  %s2 = inlined_call_operand.hbm [shape: f32[2,4,128], index: 2, kind: output, shape index: {}]
  %s3 = sld [smem:[#allocation0]]
  $region45: #{tpu_custom_call.1} parent=0
    _
  %s5 = ssub.s32 1, %s3
  %s6 = scalar_select 0, %s5, %s3
  $region1: #{tpu_custom_call.1} parent=0
    #allocation4 [shape = 'u8[4096]{0}', space=vmem, size = 0x1000, scoped, tag = 'output window, operand 0']
    #allocation5 [shape = 's32[2]{0}', space=sflag, size = 0x8, scoped, tag = 'scoped memory for tpu_custom_call.1']
    %7 = vsyncpa [#allocation5], 0
    %s8 = scalar_lea.sflag [#allocation5], 1
    %9 = vsyncpa %s8, 0
    loop: start=0, step=1, limit=4
    $region2: #{tpu_custom_call.1} parent=1 // loop_pre_header
      _
    $region3: #{tpu_custom_call.1} parent=1 // loop_header
      %s11 = sphi 0, %s15
      %p12 = scmp.ge.s32.totalorder %s11, 4
      %s18 = sphi 0, %s37
      %s19 = sphi 0, %s33
      %s20 = sphi 0, %s29
      %s21 = sphi 0, %s18
      %s22 = sphi 0, %s19
      %s23 = sphi 0, %s20
      %s24 = sphi 0, %s21
      %s25 = sphi 0, %s22
      %s26 = sphi 0, %s23
      %s42 = sphi 0, %s44
      %s45 = sphi 0, %s42
      %s46 = sphi 0, %s45
      %s62 = sphi 0, %s46
      %s70 = sphi 0, %s72
      %s73 = sphi 0, %s70
      %s74 = sphi 0, %s73
      %s90 = sphi 0, %s74
      %s98 = sphi 0, %s100
      %s101 = sphi 0, %s98
      %s102 = sphi 0, %s101
      %s118 = sphi 0, %s102
    $region4: #{tpu_custom_call.1} parent=1 // loop_header_branch
      %14 = sbr.rel (%p12) target = $region8
    $region5: #{tpu_custom_call.1} parent=1 // loop_body
      %s16 = ssub.s32 %s11, 1
      %s17 = ssub.s32 %s11, 2
      %s27 = sadd.s32 1, %s20
      %p28 = scmp.ge.s32.totalorder %s27, 1
      %s29 = scalar_select %p28, 0, %s27
      %s30 = sadd.s32 1, %s19
      %s31 = scalar_select %p28, %s30, %s19
      %p32 = scmp.ge.s32.totalorder %s31, 1
      %s33 = scalar_select %p32, 0, %s31
      %s34 = sadd.s32 1, %s18
      %s35 = scalar_select %p32, %s34, %s18
      %p36 = scmp.ge.s32.totalorder %s35, 2
      %s37 = scalar_select %p36, 0, %s35
      %s38 = ssub.s32 %s18, %s37
      %s39 = ssub.s32 %s19, %s33
      %s40 = sor.u32 %s38, %s39
      %p41 = scmp.eq.s32.totalorder %s40, 0
      %s43 = sadd.s32 %s42, 1
      %s44 = scalar_select %p41, %s42, %s43
      %p47 = pneg %p41
      %p48 = scmp.eq.s32.totalorder %s11, 1
      %p49 = por %p47, %p48
      %p50 = scmp.ne.s32.totalorder %s42, %s45
      %p51 = scmp.eq.s32.totalorder %s11, 0
      %p52 = por %p50, %p51
      %p53 = scmp.ne.s32.totalorder %s42, %s45
      %p54 = scmp.eq.s32.totalorder %s16, 1
      %p55 = por %p53, %p54
      %p56 = scmp.ne.s32.totalorder %s45, %s46
      %p57 = scmp.eq.s32.totalorder %s16, 0
      %p58 = por %p56, %p57
      %p59 = scmp.ne.s32.totalorder %s45, %s46
      %p60 = scmp.eq.s32.totalorder %s17, 1
      %p61 = por %p59, %p60
      %p63 = scmp.ne.s32.totalorder %s46, %s62
      %p64 = scmp.eq.s32.totalorder %s17, 0
      %p65 = por %p63, %p64
      %s66 = ssub.s32 %s18, %s37
      %s67 = ssub.s32 %s20, %s29
      %s68 = sor.u32 %s66, %s67
      %p69 = scmp.eq.s32.totalorder %s68, 0
      %s71 = sadd.s32 %s70, 1
      %s72 = scalar_select %p69, %s70, %s71
      %p75 = pneg %p69
      %p76 = scmp.eq.s32.totalorder %s11, 1
      %p77 = por %p75, %p76
      %p78 = scmp.ne.s32.totalorder %s70, %s73
      %p79 = scmp.eq.s32.totalorder %s11, 0
      %p80 = por %p78, %p79
      %p81 = scmp.ne.s32.totalorder %s70, %s73
      %p82 = scmp.eq.s32.totalorder %s16, 1
      %p83 = por %p81, %p82
      %p84 = scmp.ne.s32.totalorder %s73, %s74
      %p85 = scmp.eq.s32.totalorder %s16, 0
      %p86 = por %p84, %p85
      %p87 = scmp.ne.s32.totalorder %s73, %s74
      %p88 = scmp.eq.s32.totalorder %s17, 1
      %p89 = por %p87, %p88
      %p91 = scmp.ne.s32.totalorder %s74, %s90
      %p92 = scmp.eq.s32.totalorder %s17, 0
      %p93 = por %p91, %p92
      %s94 = ssub.s32 %s18, %s37
      %s95 = ssub.s32 %s19, %s33
      %s96 = sor.u32 %s94, %s95
      %p97 = scmp.eq.s32.totalorder %s96, 0
      %s99 = sadd.s32 %s98, 1
      %s100 = scalar_select %p97, %s98, %s99
      %p103 = pneg %p97
      %p104 = scmp.eq.s32.totalorder %s11, 1
      %p105 = por %p103, %p104
      %p106 = scmp.ne.s32.totalorder %s98, %s101
      %p107 = scmp.eq.s32.totalorder %s11, 0
      %p108 = por %p106, %p107
      %p109 = scmp.ne.s32.totalorder %s98, %s101
      %p110 = scmp.eq.s32.totalorder %s16, 1
      %p111 = por %p109, %p110
      %p112 = scmp.ne.s32.totalorder %s101, %s102
      %p113 = scmp.eq.s32.totalorder %s16, 0
      %p114 = por %p112, %p113
      %p115 = scmp.ne.s32.totalorder %s101, %s102
      %p116 = scmp.eq.s32.totalorder %s17, 1
      %p117 = por %p115, %p116
      %p119 = scmp.ne.s32.totalorder %s102, %s118
      %p120 = scmp.eq.s32.totalorder %s17, 0
      %p121 = por %p119, %p120
      %p122 = scmp.le.s32.totalorder 1, %s11
      %p123 = scmp.lt.s32.totalorder %s11, 3
      %p124 = pnand %p122, %p123
      %p125 = pneg %p124
      // Predicated region
      $region9: #{tpu_custom_call.1} parent=5 // pred_check
        _
      $region10: #{tpu_custom_call.1} parent=5 // pred_check_branch
        %127 = sbr.rel (%p124) target = $region12
      $region11: #{tpu_custom_call.1} parent=5 // pred_region
        %s128 = ssub.s32 %s11, 1
      $region12: #{tpu_custom_call.1} parent=5 // pred_fallthru
        _
      %p129 = scmp.lt.s32.totalorder %s11, 2
      // Predicated region
      $region13: #{tpu_custom_call.1} parent=5 // pred_check
        %p130 = pneg %p129
      $region14: #{tpu_custom_call.1} parent=5 // pred_check_branch
        %132 = sbr.rel (%p130) target = $region16
      $region15: #{tpu_custom_call.1} parent=5 // pred_region
        // Predicated region
        $region17: #{tpu_custom_call.1} parent=15 // pred_check
          %p133 = pneg %p52
        $region18: #{tpu_custom_call.1} parent=15 // pred_check_branch
          %135 = sbr.rel (%p133) target = $region20
        $region19: #{tpu_custom_call.1} parent=15 // pred_region
          %p136 = scmp.lt.s32.totalorder %s18, 1
          %s137 = scalar_select %p136, %s18, 1
          %p138 = scmp.lt.s32.totalorder %s19, 0
          %s139 = scalar_select %p138, %s19, 0
          %s140 = sadd.s32 %s139, %s137
          %s141 = smul.addr %s140, 4
          %s142 = scalar_lea.vmem %s0, %s141
        $region20: #{tpu_custom_call.1} parent=15 // pred_fallthru
          _
        // Predicated region
        $region21: #{tpu_custom_call.1} parent=15 // pred_check
          %p143 = pneg %p80
        $region22: #{tpu_custom_call.1} parent=15 // pred_check_branch
          %145 = sbr.rel (%p143) target = $region24
        $region23: #{tpu_custom_call.1} parent=15 // pred_region
          %s146 = smul.u32 2, %s20
          %p147 = scmp.lt.s32.totalorder %s18, 1
          %s148 = scalar_select %p147, %s18, 1
          %p149 = scmp.lt.s32.totalorder %s146, 1
          %s150 = scalar_select %p149, %s146, 1
          %s151 = smul.addr %s148, 2
          %s152 = sadd.s32 %s150, %s151
          %s153 = smul.addr %s152, 4
          %s154 = scalar_lea.vmem %s1, %s153
          %s155 = smul.u32 2, %s20
        $region24: #{tpu_custom_call.1} parent=15 // pred_fallthru
          _
      $region16: #{tpu_custom_call.1} parent=5 // pred_fallthru
        _
      %p156 = scmp.le.s32.totalorder 1, %s11
      %p157 = scmp.lt.s32.totalorder %s11, 3
      %p158 = pnand %p156, %p157
      %p159 = pneg %p158
      // Predicated region
      $region25: #{tpu_custom_call.1} parent=5 // pred_check
        _
      $region26: #{tpu_custom_call.1} parent=5 // pred_check_branch
        %161 = sbr.rel (%p158) target = $region28
      $region27: #{tpu_custom_call.1} parent=5 // pred_region
        %s162 = ssub.s32 %s11, 1
        %p163 = scmp.lt.s32.totalorder %s21, 1
        %s164 = scalar_select %p163, %s21, 1
        %p165 = scmp.lt.s32.totalorder %s22, 0
        %s166 = scalar_select %p165, %s22, 0
        %s167 = sadd.s32 %s166, %s164
        %s168 = smul.addr %s167, 4
        %s169 = scalar_lea.vmem %s0, %s168
        %p170 = pneg %p58
        %p171 = pneg %p55
        %s172 = smul.u32 2, %s23
        %p173 = scmp.lt.s32.totalorder %s21, 1
        %s174 = scalar_select %p173, %s21, 1
        %p175 = scmp.lt.s32.totalorder %s172, 1
        %s176 = scalar_select %p175, %s172, 1
        %s177 = smul.addr %s174, 2
        %s178 = sadd.s32 %s176, %s177
        %s179 = smul.addr %s178, 4
        %s180 = scalar_lea.vmem %s1, %s179
        %p181 = pneg %p86
        %p182 = pneg %p83
        %p183 = pneg %p114
        %p184 = pneg %p111
        %s185 = sand.u32 %s101, 1
        %s186 = scalar_lea.sflag [#allocation5], %s185
        %s187 = sand.u32 %s101, 1
        %s188 = smul.addr %s187, 4
        %s189 = scalar_lea.vmem [#allocation4], %s188
        %p190 = scmp.lt.s32.totalorder %s21, 1
        %s191 = scalar_select %p190, %s21, 1
        %p192 = scmp.lt.s32.totalorder %s22, 0
        %s193 = scalar_select %p192, %s22, 0
        %s194 = sadd.s32 %s193, %s191
        %s195 = smul.addr %s194, 4
        %s196 = scalar_lea.vmem %s0, %s195
        %s197 = smul.u32 2, %s23
        %p198 = scmp.lt.s32.totalorder %s21, 1
        %s199 = scalar_select %p198, %s21, 1
        %p200 = scmp.lt.s32.totalorder %s197, 1
        %s201 = scalar_select %p200, %s197, 1
        %s202 = smul.addr %s199, 2
        %s203 = sadd.s32 %s201, %s202
        %s204 = smul.addr %s203, 4
        %s205 = scalar_lea.vmem %s1, %s204
        %s206 = smul.u32 2, %s23
        %p207 = scmp.eq.s32.totalorder %s23, 0
        // Predicated region
        $region29: #{tpu_custom_call.1} parent=27 // pred_check
          %p208 = pneg %p207
        $region30: #{tpu_custom_call.1} parent=27 // pred_check_branch
          %210 = sbr.rel (%p208) target = $region32
        $region31: #{tpu_custom_call.1} parent=27 // pred_region
          %v211 = vld [vmem:[%s196] sm:$0x7]
          %v212 = vmax.f32 %v211, -1.0
          %v213 = vmin.f32 %v212, 1.0
          %v214 = vadd.f32 %v213, 1.0
          %v215 = vmul.f32 %v214, 0.5
          %v216 = vmul.f32 %v215, 7.0
          %v217 = vmul.f32 %v215, 3.0
          %v218 = vfloor.f32 %v216
          %v219 = vfloor.f32 %v217
          %v220 = vsub.f32 %v216, %v218
          %v221 = vsub.f32 %v217, %v219
          %v222 = vsub.f32 %v218, 3.5
          %v223 = vrcp.pop 3.5
          %v224 = vmul.f32 %v222, %v223
          %v225 = vmax.f32 %v224, -1.0
          %v226 = vmin.f32 %v225, 1.0
          %v227 = vadd.f32 %v226, 1.0
          %v228 = vmul.f32 %v227, 8.0
          %v229 = vsub.f32 %v228, 1.0
          %v230 = vmul.f32 %v229, 0.5
          %v231 = vadd.f32 %v230, 0.5
          %v232 = vfloor.f32 %v231
          %vm233 = vcmp.ge.f32.partialorder %v232, 0.0
          %vm234 = vcmp.le.f32.partialorder %v232, 7.0
          %vm235 = vmand %vm233, %vm234
          %v236 = vmax.f32 %v232, 0.0
          %v237 = vmin.f32 %v236, 7.0
          %v238 = vcvt.f32.s32.to.zero.pseudo %v237
          %v239 = vadd.f32 %v218, 1.0
          %v240 = vsub.f32 %v239, 3.5
          %v241 = vmul.f32 %v240, %v223
          %v242 = vmax.f32 %v241, -1.0
          %v243 = vmin.f32 %v242, 1.0
          %v244 = vadd.f32 %v243, 1.0
          %v245 = vmul.f32 %v244, 8.0
          %v246 = vsub.f32 %v245, 1.0
          %v247 = vmul.f32 %v246, 0.5
          %v248 = vadd.f32 %v247, 0.5
          %v249 = vfloor.f32 %v248
          %vm250 = vcmp.ge.f32.partialorder %v249, 0.0
          %vm251 = vcmp.le.f32.partialorder %v249, 7.0
          %vm252 = vmand %vm250, %vm251
          %v253 = vmax.f32 %v249, 0.0
          %v254 = vmin.f32 %v253, 7.0
          %v255 = vcvt.f32.s32.to.zero.pseudo %v254
          %v256 = vcvt.f32.s32.to.zero.pseudo %v219
          %vm257 = vcmp.gt.s32.totalorder %v256, 0
          %v258 = vsel %vm257, %v256, 0
          %vm259 = vcmp.lt.s32.totalorder %v258, 3
          %v260 = vsel %vm259, %v258, 3
          %v261 = vadd.f32 %v219, 1.0
          %v262 = vcvt.f32.s32.to.zero.pseudo %v261
          %vm263 = vcmp.gt.s32.totalorder %v262, 0
          %v264 = vsel %vm263, %v262, 0
          %vm265 = vcmp.lt.s32.totalorder %v264, 3
          %v266 = vsel %vm265, %v264, 3
          %v267 = vsub.f32 1.0, %v220
          %v268 = vsel %vm235, 1, 0
          %v269 = vcvt.s32.f32 %v268
          %v270 = vmul.f32 %v267, %v269
          %v271 = vsel %vm252, 1, 0
          %v272 = vcvt.s32.f32 %v271
          %v273 = vmul.f32 %v220, %v272
          %v274 = vlaneseq
          %v275 = vshrl.u32 %v274, 7
          %v276 = vadd.s32 %v275, 8
          %v277 = vadd.s32 %v275, 16
          %v278 = vadd.s32 %v275, 24
          %v279 = vadd.s32 %v275, 32
          %v280 = vadd.s32 %v275, 40
          %v281 = vadd.s32 %v275, 48
          %v282 = vadd.s32 %v275, 56
          %v283 = vmul.u32 %v238, 8
          %v284 = vrot.slane %v238, 7
          %v285 = vadd.s32 %v283, %v284
          %v286 = vlaneseq
          %v287 = vshrl.u32 %v286, 7
          %v288 = vsub.s32 1, %v287
          %v289 = vrot.slane %v285, %v288
          %vm290 = vcmp.eq.s32.totalorder %v275, %v289
          %vm291 = vcmp.eq.s32.totalorder %v276, %v289
          %vm292 = vcmp.eq.s32.totalorder %v277, %v289
          %vm293 = vcmp.eq.s32.totalorder %v278, %v289
          %vm294 = vcmp.eq.s32.totalorder %v279, %v289
          %vm295 = vcmp.eq.s32.totalorder %v280, %v289
          %vm296 = vcmp.eq.s32.totalorder %v281, %v289
          %vm297 = vcmp.eq.s32.totalorder %v282, %v289
          %v299 = vrot.slane %v270, 7
          %v301 = vmul.f32 %v270, %v299
          %v302 = vlaneseq
          %v303 = vshrl.u32 %v302, 7
          %v304 = vsub.s32 1, %v303
          %v305 = vrot.slane %v301, %v304
          %v306 = vsel %vm290, %v305, 0.0
          %v307 = vsel %vm291, %v305, 0.0
          %v308 = vsel %vm292, %v305, 0.0
          %v309 = vsel %vm293, %v305, 0.0
          %v310 = vsel %vm294, %v305, 0.0
          %v311 = vsel %vm295, %v305, 0.0
          %v312 = vsel %vm296, %v305, 0.0
          %v313 = vsel %vm297, %v305, 0.0
          %v314 = vrot.slane %v255, 7
          %v315 = vadd.s32 %v283, %v314
          %v316 = vlaneseq
          %v317 = vshrl.u32 %v316, 7
          %v318 = vsub.s32 1, %v317
          %v319 = vrot.slane %v315, %v318
          %vm320 = vcmp.eq.s32.totalorder %v275, %v319
          %vm321 = vcmp.eq.s32.totalorder %v276, %v319
          %vm322 = vcmp.eq.s32.totalorder %v277, %v319
          %vm323 = vcmp.eq.s32.totalorder %v278, %v319
          %vm324 = vcmp.eq.s32.totalorder %v279, %v319
          %vm325 = vcmp.eq.s32.totalorder %v280, %v319
          %vm326 = vcmp.eq.s32.totalorder %v281, %v319
          %vm327 = vcmp.eq.s32.totalorder %v282, %v319
          %v329 = vrot.slane %v273, 7
          %v331 = vmul.f32 %v270, %v329
          %v332 = vlaneseq
          %v333 = vshrl.u32 %v332, 7
          %v334 = vsub.s32 1, %v333
          %v335 = vrot.slane %v331, %v334
          %v336 = vsel %vm320, %v335, 0.0
          %v337 = vsel %vm321, %v335, 0.0
          %v338 = vsel %vm322, %v335, 0.0
          %v339 = vsel %vm323, %v335, 0.0
          %v340 = vsel %vm324, %v335, 0.0
          %v341 = vsel %vm325, %v335, 0.0
          %v342 = vsel %vm326, %v335, 0.0
          %v343 = vsel %vm327, %v335, 0.0
          %v344 = vadd.f32 %v306, %v336
          %v345 = vadd.f32 %v307, %v337
          %v346 = vadd.f32 %v308, %v338
          %v347 = vadd.f32 %v309, %v339
          %v348 = vadd.f32 %v310, %v340
          %v349 = vadd.f32 %v311, %v341
          %v350 = vadd.f32 %v312, %v342
          %v351 = vadd.f32 %v313, %v343
          %v352 = vmul.u32 %v255, 8
          %v353 = vadd.s32 %v352, %v284
          %v354 = vlaneseq
          %v355 = vshrl.u32 %v354, 7
          %v356 = vsub.s32 1, %v355
          %v357 = vrot.slane %v353, %v356
          %vm358 = vcmp.eq.s32.totalorder %v275, %v357
          %vm359 = vcmp.eq.s32.totalorder %v276, %v357
          %vm360 = vcmp.eq.s32.totalorder %v277, %v357
          %vm361 = vcmp.eq.s32.totalorder %v278, %v357
          %vm362 = vcmp.eq.s32.totalorder %v279, %v357
          %vm363 = vcmp.eq.s32.totalorder %v280, %v357
          %vm364 = vcmp.eq.s32.totalorder %v281, %v357
          %vm365 = vcmp.eq.s32.totalorder %v282, %v357
          %v366 = vmul.f32 %v273, %v299
          %v367 = vlaneseq
          %v368 = vshrl.u32 %v367, 7
          %v369 = vsub.s32 1, %v368
          %v370 = vrot.slane %v366, %v369
          %v371 = vsel %vm358, %v370, 0.0
          %v372 = vsel %vm359, %v370, 0.0
          %v373 = vsel %vm360, %v370, 0.0
          %v374 = vsel %vm361, %v370, 0.0
          %v375 = vsel %vm362, %v370, 0.0
          %v376 = vsel %vm363, %v370, 0.0
          %v377 = vsel %vm364, %v370, 0.0
          %v378 = vsel %vm365, %v370, 0.0
          %v379 = vadd.f32 %v344, %v371
          %v380 = vadd.f32 %v345, %v372
          %v381 = vadd.f32 %v346, %v373
          %v382 = vadd.f32 %v347, %v374
          %v383 = vadd.f32 %v348, %v375
          %v384 = vadd.f32 %v349, %v376
          %v385 = vadd.f32 %v350, %v377
          %v386 = vadd.f32 %v351, %v378
          %v387 = vadd.s32 %v352, %v314
          %v388 = vlaneseq
          %v389 = vshrl.u32 %v388, 7
          %v390 = vsub.s32 1, %v389
          %v391 = vrot.slane %v387, %v390
          %vm392 = vcmp.eq.s32.totalorder %v275, %v391
          %vm393 = vcmp.eq.s32.totalorder %v276, %v391
          %vm394 = vcmp.eq.s32.totalorder %v277, %v391
          %vm395 = vcmp.eq.s32.totalorder %v278, %v391
          %vm396 = vcmp.eq.s32.totalorder %v279, %v391
          %vm397 = vcmp.eq.s32.totalorder %v280, %v391
          %vm398 = vcmp.eq.s32.totalorder %v281, %v391
          %vm399 = vcmp.eq.s32.totalorder %v282, %v391
          %v400 = vmul.f32 %v273, %v329
          %v401 = vlaneseq
          %v402 = vshrl.u32 %v401, 7
          %v403 = vsub.s32 1, %v402
          %v404 = vrot.slane %v400, %v403
          %v405 = vsel %vm392, %v404, 0.0
          %v406 = vsel %vm393, %v404, 0.0
          %v407 = vsel %vm394, %v404, 0.0
          %v408 = vsel %vm395, %v404, 0.0
          %v409 = vsel %vm396, %v404, 0.0
          %v410 = vsel %vm397, %v404, 0.0
          %v411 = vsel %vm398, %v404, 0.0
          %v412 = vsel %vm399, %v404, 0.0
          %v413 = vadd.f32 %v379, %v405
          %v414 = vadd.f32 %v380, %v406
          %v415 = vadd.f32 %v381, %v407
          %v416 = vadd.f32 %v382, %v408
          %v417 = vadd.f32 %v383, %v409
          %v418 = vadd.f32 %v384, %v410
          %v419 = vadd.f32 %v385, %v411
          %v420 = vadd.f32 %v386, %v412
          %421 = vst [vmem:[#allocation2] sm:$0xff] %v413
          %422 = vst [vmem:[#allocation2 + $0x8] sm:$0xff] %v414
          %423 = vst [vmem:[#allocation2 + $0x10] sm:$0xff] %v415
          %424 = vst [vmem:[#allocation2 + $0x18] sm:$0xff] %v416
          %425 = vst [vmem:[#allocation2 + $0x20] sm:$0xff] %v417
          %426 = vst [vmem:[#allocation2 + $0x28] sm:$0xff] %v418
          %427 = vst [vmem:[#allocation2 + $0x30] sm:$0xff] %v419
          %428 = vst [vmem:[#allocation2 + $0x38] sm:$0xff] %v420
          %v429 = vlaneseq
          %v430 = vshrl.u32 %v429, 7
          %v431 = vsub.s32 2, %v430
          %v432 = vrot.slane %v260, %v431
          %vm433 = vcmp.eq.s32.totalorder %v275, %v432
          %v434 = vsub.f32 1.0, %v221
          %v435 = vlaneseq
          %v436 = vshrl.u32 %v435, 7
          %v437 = vsub.s32 2, %v436
          %v438 = vrot.slane %v434, %v437
          %v439 = vsel %vm433, %v438, 0.0
          %v440 = vlaneseq
          %v441 = vshrl.u32 %v440, 7
          %v442 = vsub.s32 2, %v441
          %v443 = vrot.slane %v266, %v442
          %vm444 = vcmp.eq.s32.totalorder %v275, %v443
          %v445 = vlaneseq
          %v446 = vshrl.u32 %v445, 7
          %v447 = vsub.s32 2, %v446
          %v448 = vrot.slane %v221, %v447
          %v449 = vsel %vm444, %v448, 0.0
          %v450 = vadd.f32 %v439, %v449
          %451 = vst [vmem:[#allocation3] sm:$0xf] %v450
          %452 = vst [vmem:[%s189] sm:$0xf] 0.0
        $region32: #{tpu_custom_call.1} parent=27 // pred_fallthru
          _
        %v453 = vld [vmem:[#allocation3] sm:$0xf]
        %v456 = vunpack.c.l.s4 1966171168
        %v457 = vunpack.c.0.s8 %v456
        %v458 = vlaneseq
        %v459 = vshrl.u32 %v458, 7
        %v460 = vsub.s32 %v457, %v459
        %v461 = vrot.slane %v453, %v460
        %v462 = vcombine.high %v461, %v461
        %v464 = vunpack.c.l.s4 1966171168
        %v465 = vunpack.c.0.s8 %v464
        %v466 = vlaneseq
        %v467 = vshrl.u32 %v466, 7
        %v468 = vsub.s32 %v465, %v467
        %v469 = vrot.slane %v461, %v468
        %v471 = vunpack.c.l.s4 1966171168
        %v472 = vunpack.c.0.s8 %v471
        %v473 = vlaneseq
        %v474 = vshrl.u32 %v473, 7
        %v475 = vsub.s32 %v472, %v474
        %v476 = vrot.slane %v462, %v475
        %v477 = vcombine.high %v469, %v469
        %v478 = vcombine.high %v476, %v476
        %v479 = vld [vmem:[#allocation2] sm:$0xff]
        %v480 = vld [vmem:[#allocation2 + $0x8] sm:$0xff]
        %v481 = vld [vmem:[#allocation2 + $0x10] sm:$0xff]
        %v482 = vld [vmem:[#allocation2 + $0x18] sm:$0xff]
        %v483 = vld [vmem:[#allocation2 + $0x20] sm:$0xff]
        %v484 = vld [vmem:[#allocation2 + $0x28] sm:$0xff]
        %v485 = vld [vmem:[#allocation2 + $0x30] sm:$0xff]
        %v486 = vld [vmem:[#allocation2 + $0x38] sm:$0xff]
        %v487 = vlaneseq
        %v488 = vshrl.u32 %v487, 7
        %v489 = vsub.s32 0, %v488
        %v490 = vrot.slane %v469, %v489
        %v491 = vlaneseq
        %v492 = vshrl.u32 %v491, 7
        %v493 = vsub.s32 0, %v492
        %v494 = vrot.slane %v476, %v493
        %v495 = vlaneseq
        %v496 = vshrl.u32 %v495, 7
        %v497 = vsub.s32 0, %v496
        %v498 = vrot.slane %v477, %v497
        %v499 = vlaneseq
        %v500 = vshrl.u32 %v499, 7
        %v501 = vsub.s32 0, %v500
        %v502 = vrot.slane %v478, %v501
        %v507 = vmul.f32 %v490, %v479
        %v508 = vmul.f32 %v490, %v480
        %v509 = vmul.f32 %v490, %v481
        %v510 = vmul.f32 %v490, %v482
        %v511 = vmul.f32 %v490, %v483
        %v512 = vmul.f32 %v490, %v484
        %v513 = vmul.f32 %v490, %v485
        %v514 = vmul.f32 %v490, %v486
        %v515 = vmul.f32 %v494, %v479
        %v516 = vmul.f32 %v494, %v480
        %v517 = vmul.f32 %v494, %v481
        %v518 = vmul.f32 %v494, %v482
        %v519 = vmul.f32 %v494, %v483
        %v520 = vmul.f32 %v494, %v484
        %v521 = vmul.f32 %v494, %v485
        %v522 = vmul.f32 %v494, %v486
        %v523 = vmul.f32 %v498, %v479
        %v524 = vmul.f32 %v498, %v480
        %v525 = vmul.f32 %v498, %v481
        %v526 = vmul.f32 %v498, %v482
        %v527 = vmul.f32 %v498, %v483
        %v528 = vmul.f32 %v498, %v484
        %v529 = vmul.f32 %v498, %v485
        %v530 = vmul.f32 %v498, %v486
        %v531 = vmul.f32 %v502, %v479
        %v532 = vmul.f32 %v502, %v480
        %v533 = vmul.f32 %v502, %v481
        %v534 = vmul.f32 %v502, %v482
        %v535 = vmul.f32 %v502, %v483
        %v536 = vmul.f32 %v502, %v484
        %v537 = vmul.f32 %v502, %v485
        %v538 = vmul.f32 %v502, %v486
        %v539 = vld [vmem:[%s205] sm:$0xff]
        %v540 = vld [vmem:[%s189] sm:$0xf]
        %v542 = vcombine.high %v539, %v539
        %544 = vmatprep.subr.mxu0 0.0
        %545 = vmatpush1.msra.mxu0 %v507
        %546 = vmatprep.subr.mxu0 0.0
        %547 = vmatpush1.msra.mxu0 %v508
        %548 = vmatprep.subr.mxu0 0.0
        %549 = vmatpush1.msra.mxu0 %v509
        %550 = vmatprep.subr.mxu0 0.0
        %551 = vmatpush1.msra.mxu0 %v510
        %552 = vmatprep.subr.mxu0 0.0
        %553 = vmatpush1.msra.mxu0 %v511
        %554 = vmatprep.subr.mxu0 0.0
        %555 = vmatpush1.msra.mxu0 %v512
        %556 = vmatprep.subr.mxu0 0.0
        %557 = vmatpush1.msra.mxu0 %v513
        %558 = vmatprep.subr.mxu0 0.0
        %559 = vmatpush1.msra.mxu0 %v514
        %560 = vmatprep.subr.mxu0 0.0
        %561 = vmatpush1.msra.mxu0 %v515
        %562 = vmatprep.subr.mxu0 0.0
        %563 = vmatpush1.msra.mxu0 %v516
        %564 = vmatprep.subr.mxu0 0.0
        %565 = vmatpush1.msra.mxu0 %v517
        %566 = vmatprep.subr.mxu0 0.0
        %567 = vmatpush1.msra.mxu0 %v518
        %568 = vmatprep.subr.mxu0 0.0
        %569 = vmatpush1.msra.mxu0 %v519
        %570 = vmatprep.subr.mxu0 0.0
        %571 = vmatpush1.msra.mxu0 %v520
        %572 = vmatprep.subr.mxu0 0.0
        %573 = vmatpush1.msra.mxu0 %v521
        %574 = vmatprep.subr.mxu0 0.0
        %575 = vmatpush1.msra.mxu0 %v522
        %576 = vmatprep.subr.mxu0 0.0
        %577 = vmatpush1.msra.mxu0 %v523
        %578 = vmatprep.subr.mxu0 0.0
        %579 = vmatpush1.msra.mxu0 %v524
        %580 = vmatprep.subr.mxu0 0.0
        %581 = vmatpush1.msra.mxu0 %v525
        %582 = vmatprep.subr.mxu0 0.0
        %583 = vmatpush1.msra.mxu0 %v526
        %584 = vmatprep.subr.mxu0 0.0
        %585 = vmatpush1.msra.mxu0 %v527
        %586 = vmatprep.subr.mxu0 0.0
        %587 = vmatpush1.msra.mxu0 %v528
        %588 = vmatprep.subr.mxu0 0.0
        %589 = vmatpush1.msra.mxu0 %v529
        %590 = vmatprep.subr.mxu0 0.0
        %591 = vmatpush1.msra.mxu0 %v530
        %592 = vmatprep.subr.mxu0 0.0
        %593 = vmatpush1.msra.mxu0 %v531
        %594 = vmatprep.subr.mxu0 0.0
        %595 = vmatpush1.msra.mxu0 %v532
        %596 = vmatprep.subr.mxu0 0.0
        %597 = vmatpush1.msra.mxu0 %v533
        %598 = vmatprep.subr.mxu0 0.0
        %599 = vmatpush1.msra.mxu0 %v534
        %600 = vmatprep.subr.mxu0 0.0
        %601 = vmatpush1.msra.mxu0 %v535
        %602 = vmatprep.subr.mxu0 0.0
        %603 = vmatpush1.msra.mxu0 %v536
        %604 = vmatprep.subr.mxu0 0.0
        %605 = vmatpush1.msra.mxu0 %v537
        %606 = vmatprep.subr.mxu0 0.0
        %607 = vmatpush1.msra.mxu0 %v538
        %608 = vmatprep.mubr.f32.mxu0 %v542
        %609 = vmatmul.mubr.f32.gmra.mrb[0].mxu0 %v539
        %v610 = vpop.f32.mrb[0].mxu0
        %v611 = vadd.f32 0.0, %v610
        %v612 = vpop.f32.mrb[0].mxu0
        %613 = vdwg.mxu0
        %v614 = vadd.f32 %v540, %v611
        %615 = vst [vmem:[%s189] sm:$0xf] %v614
        %s616 = sand.u32 %s101, 1
        %s617 = scalar_lea.sflag [#allocation5], %s616
        %s618 = sand.u32 %s101, 1
        %s619 = smul.addr %s618, 4
        %s620 = scalar_lea.vmem [#allocation4], %s619
        // Predicated region
        $region33: #{tpu_custom_call.1} parent=27 // pred_check
          %p621 = pneg %p111
        $region34: #{tpu_custom_call.1} parent=27 // pred_check_branch
          %623 = sbr.rel (%p621) target = $region36
        $region35: #{tpu_custom_call.1} parent=27 // pred_region
          %s625 = ssub.s32 64, 64
          %626 = vsyncadd %s617, %s625
          %s627 = sadd.s32 %s22, %s21
          %s628 = smul.addr %s627, 64
          %s629 = scalar_lea.hbm %s2, %s628
          %s631 = sshll.u32 %s620, 4
          %s632 = int_to_ptr.vmem [resolvable:$true] %s631
          %634 = dma.vmem_to_hbm [thread:$0]  %s632, 64, %s629, %s617
        $region36: #{tpu_custom_call.1} parent=27 // pred_fallthru
          _
      $region28: #{tpu_custom_call.1} parent=5 // pred_fallthru
        _
      %p635 = scmp.le.s32.totalorder 2, %s11
      // Predicated region
      $region37: #{tpu_custom_call.1} parent=5 // pred_check
        %p636 = pneg %p635
      $region38: #{tpu_custom_call.1} parent=5 // pred_check_branch
        %638 = sbr.rel (%p636) target = $region40
      $region39: #{tpu_custom_call.1} parent=5 // pred_region
        %s639 = ssub.s32 %s11, 2
        // Predicated region
        $region41: #{tpu_custom_call.1} parent=39 // pred_check
          %p640 = pneg %p117
        $region42: #{tpu_custom_call.1} parent=39 // pred_check_branch
          %642 = sbr.rel (%p640) target = $region44
        $region43: #{tpu_custom_call.1} parent=39 // pred_region
          %s643 = sand.u32 %s102, 1
          %s644 = scalar_lea.sflag [#allocation5], %s643
          %s645 = sand.u32 %s102, 1
          %s646 = smul.addr %s645, 4
          %s647 = scalar_lea.vmem [#allocation4], %s646
          %648 = dma.done %s644, 64
        $region44: #{tpu_custom_call.1} parent=39 // pred_fallthru
          _
      $region40: #{tpu_custom_call.1} parent=5 // pred_fallthru
        _
    $region6: #{tpu_custom_call.1} parent=1 // loop_footer
      %s15 = sadd.s32 1, %s11
    $region7: #{tpu_custom_call.1} parent=1 // loop_footer_branch
      %10 = sbr.rel target = $region3
    $region8: #{tpu_custom_call.1} parent=1 // loop_exit
      _
    %649 = vsyncpa [#allocation5], 1
    %s650 = scalar_lea.sflag [#allocation5], 1
    %651 = vsyncpa %s650, 1

</llo_original>
